<compile_context>
chip_gen: v5e
topology: v5e:2x2
jax: 0.10.0
libtpu: 0.0.40
codegen_flags: <defaults>
</compile_context>

<pallas_src>
import math

import numpy as np
import jax
import jax.numpy as jnp
from jax.experimental import pallas as pl
from jax.experimental.pallas import tpu as pltpu

_LANE = 128
_MAX_TILE_LANES = 2048     # largest streaming tile we ever ask for
_LSTM_UNROLL_MAX = 16      # fully unroll the serial LSTM tail for short sequences


def _vmem_budget_bytes():
    """Per-generation scoped-VMEM budget (96 MiB on 128-MiB chips, 48 MiB on v7x)."""
    try:
        cap = int(getattr(pltpu.get_tpu_info(), "vmem_capacity_bytes", 0))
    except Exception:
        cap = 0
    if cap <= 0:
        cap = 64 * 1024 * 1024          # conservative (v7x-sized) fallback
    return max(32 * 1024 * 1024, min(cap * 3 // 4, 100 * 1024 * 1024))


def _choose_tile_lanes(B, C, L, budget_bytes, reserved_bytes):
    """Largest 128-multiple divisor of L whose double-buffered in+out stream fits."""
    if L % _LANE != 0:
        return L                        # single full-extent block (ragged small L)
    per_lane = 4 * B * C * 4            # x-in + out tile, double-buffered, f32
    best = _LANE
    cand = _LANE
    while cand <= min(L, _MAX_TILE_LANES):
        if L % cand == 0 and reserved_bytes + per_lane * cand <= budget_bytes:
            best = cand
        cand *= 2
    return best


def _build_kernel(B, C, tl, n_l, resident, unroll_lstm):
    rl = _LANE if tl % _LANE == 0 else tl      # running-max lane width
    n_chunks = tl // rl

    def kernel(x_ref, w_ih_ref, w_hh_ref, bias_ref, out_ref, *scratch):
        idx = 0
        xres_ref = None
        if resident:
            xres_ref = scratch[idx]; idx += 1
        runmax_ref = scratch[idx]; idx += 1
        film_ref = scratch[idx]; idx += 1
        xproj_ref = None
        if not unroll_lstm:
            xproj_ref = scratch[idx]; idx += 1

        p = pl.program_id(0)   # 0: pool + LSTM, 1: FiLM multiply
        l = pl.program_id(1)   # L-tile index

        # ------------- phase 0: streaming max-pool, then the tiny LSTM -------------
        @pl.when(p == 0)
        def _pool_phase():
            @pl.when(l == 0)
            def _init():
                runmax_ref[...] = jnp.full_like(runmax_ref, -jnp.inf)

            xt = x_ref[...]                                   # (B, C, tl)
            if resident:
                xres_ref[l] = xt                              # park tile for phase 1

            # Pure-VPU running max over static 128-lane chunks (no per-step XLU).
            m = runmax_ref[...]
            for k in range(n_chunks):
                m = jnp.maximum(m, xt[:, :, k * rl:(k + 1) * rl])
            runmax_ref[...] = m

            @pl.when(l == n_l - 1)
            def _lstm():
                # Single lane reduction per call: MaxPool1d(block_size == L).
                pooled = jnp.max(runmax_ref[...], axis=-1)    # (B, C)

                # Hoisted input projection: one (B,C)x(C,4C) MXU call + bias.
                x_proj = jnp.dot(pooled, w_ih_ref[...],
                                 preferred_element_type=jnp.float32) + bias_ref[...]

                w_hh = w_hh_ref[...]                          # (C, 4C), gates i|f|g|o
                # Identity mask: turns an h row (1, C) into a lane-broadcastable
                # (C, 1) column without any reshape/transpose of the big tiles.
                eye = (jax.lax.broadcasted_iota(jnp.int32, (C, C), 0) ==
                       jax.lax.broadcasted_iota(jnp.int32, (C, C), 1)
                       ).astype(jnp.float32)

                def cell(xp_row, h, c):
                    # One fused (1,C)x(C,4C) recurrent matmul per step (not 4).
                    gates = xp_row + jnp.dot(h, w_hh,
                                             preferred_element_type=jnp.float32)
                    i_g = jax.nn.sigmoid(gates[:, 0 * C:1 * C])
                    f_g = jax.nn.sigmoid(gates[:, 1 * C:2 * C])
                    g_g = jnp.tanh(gates[:, 2 * C:3 * C])
                    o_g = jax.nn.sigmoid(gates[:, 3 * C:4 * C])
                    c_new = f_g * c + i_g * g_g
                    h_new = o_g * jnp.tanh(c_new)
                    return h_new, c_new

                h0 = jnp.zeros((1, C), jnp.float32)
                c0 = jnp.zeros((1, C), jnp.float32)

                if unroll_lstm:
                    # PyTorch quirk: the LSTM sequence axis is dim 0 of (B, NB, C) == B.
                    h, c = h0, c0
                    hs = []
                    for t in range(B):
                        h, c = cell(x_proj[t:t + 1, :], h, c)
                        hs.append(h)
                    for t in range(B):              # off the recurrence critical path
                        film_ref[t] = jnp.sum(hs[t] * eye, axis=-1, keepdims=True)
                else:
                    # Long sequences: keep the serial tail in a handful of vregs.
                    xproj_ref[...] = x_proj

                    def body(t, carry):
                        h, c = carry
                        h, c = cell(xproj_ref[pl.ds(t, 1), :], h, c)
                        film_ref[t] = jnp.sum(h * eye, axis=-1, keepdims=True)
                        return (h, c)

                    jax.lax.fori_loop(0, B, body, (h0, c0))

        # ------------- phase 1: FiLM multiply, lane-dense stores --------------------
        @pl.when(p == 1)
        def _film_phase():
            xt = xres_ref[l] if resident else x_ref[...]
            out_ref[...] = xt * film_ref[...]                 # (B,C,tl) * (B,C,1)

    return kernel, rl


def tfilm_forward(x_ncw, params, block_size, *, tile_lanes=None, resident=None):
    """x_ncw: (B, C, L) float32, NCW like the PyTorch module.  Implements NB == 1."""
    B, C, L = x_ncw.shape
    assert L % block_size == 0
    nb = L // block_size
    # TODO(synk): NB == L (block_size == 1) degenerate broadcast of the original
    # module is not implemented; only NB == 1 (block_size == input_len) is.
    assert nb == 1, "Pallas TFiLM path implements NB == 1 (block_size == input_len)"

    w_ih, w_hh, b_ih, b_hh = params                     # (4C,C), (4C,C), (4C,), (4C,)
    x = x_ncw.astype(jnp.float32)
    w_ih_t = jnp.transpose(w_ih).astype(jnp.float32)    # (C, 4C), gate order i|f|g|o
    w_hh_t = jnp.transpose(w_hh).astype(jnp.float32)    # (C, 4C) fused recurrent weight
    bias = (b_ih + b_hh).reshape(1, 4 * C).astype(jnp.float32)

    budget = _vmem_budget_bytes()
    x_bytes = B * C * L * 4
    if resident is None:
        # Keep x resident in VMEM across both phases when it fits in ~half the
        # budget: HBM traffic drops from 3 passes (read, re-read, write) to 2.
        resident = x_bytes <= budget // 2

    # Fixed VMEM: weights/bias (double-buffered), running max, film, x_proj, margin.
    fixed = (2 * (2 * C * 4 * C * 4 + 4 * C * 4)
             + B * C * _LANE * 4 + B * C * 4 + B * 4 * C * 4
             + 2 * 1024 * 1024)
    if resident:
        fixed += x_bytes

    if tile_lanes is None:
        tl = _choose_tile_lanes(B, C, L, budget, fixed)
    else:
        tl = int(tile_lanes)
    assert L % tl == 0 and (tl % _LANE == 0 or tl == L), "bad L tile"
    n_l = L // tl
    resident = bool(resident) and n_l > 1   # single-tile case already stays in VMEM
    unroll_lstm = B <= _LSTM_UNROLL_MAX

    kernel, rl = _build_kernel(B, C, tl, n_l, resident, unroll_lstm)

    if resident:
        # Phase 1 keeps the last x block resident (no re-fetch); data comes from
        # the xres scratch instead of HBM.
        x_map = lambda p, l: (0, 0, l * (1 - p) + (n_l - 1) * p)
    else:
        x_map = lambda p, l: (0, 0, l)

    scratch = []
    if resident:
        scratch.append(pltpu.VMEM((n_l, B, C, tl), jnp.float32))   # resident x
    scratch.append(pltpu.VMEM((B, C, rl), jnp.float32))            # running max
    scratch.append(pltpu.VMEM((B, C, 1), jnp.float32))             # FiLM factors
    if not unroll_lstm:
        scratch.append(pltpu.VMEM((B, 4 * C), jnp.float32))        # hoisted projections

    # TODO(synk): constant-index weight blocks are still double-buffered
    # (pl.Buffered(1) would reclaim ~16*C*C bytes of VMEM for very large C).
    # TODO(synk): on v7x the fused single call keeps both grid axes "arbitrary",
    # so the pooling read is not split across the two TensorCores.
    out = pl.pallas_call(
        kernel,
        out_shape=jax.ShapeDtypeStruct((B, C, L), jnp.float32),
        grid=(2, n_l),                                   # (phase, L tile)
        in_specs=[
            pl.BlockSpec((B, C, tl), x_map),
            pl.BlockSpec((C, 4 * C), lambda p, l: (0, 0)),
            pl.BlockSpec((C, 4 * C), lambda p, l: (0, 0)),
            pl.BlockSpec((1, 4 * C), lambda p, l: (0, 0)),
        ],
        out_specs=pl.BlockSpec((B, C, tl), lambda p, l: (0, 0, l * p)),
        scratch_shapes=scratch,
        compiler_params=pltpu.CompilerParams(
            dimension_semantics=("arbitrary", "arbitrary"),
            vmem_limit_bytes=int(budget)),
    )(x, w_ih_t, w_hh_t, bias)

    return out


def tfilm_reference(x, params, block_size):
    """Pure-JAX reference mirroring the (fixed) PyTorch forward, NCW layout."""
    w_ih, w_hh, b_ih, b_hh = params
    B, C, L = x.shape
    NB = L // block_size
    pooled = jnp.max(x.reshape(B, C, NB, block_size), axis=-1)    # (B, C, NB)
    seq = jnp.transpose(pooled, (0, 2, 1))                        # (B, NB, C); seq axis = 0

    def step(carry, xt):
        h, c = carry
        gates = xt @ w_ih.T + b_ih + h @ w_hh.T + b_hh
        i = jax.nn.sigmoid(gates[:, :C])
        f = jax.nn.sigmoid(gates[:, C:2 * C])
        g = jnp.tanh(gates[:, 2 * C:3 * C])
        o = jax.nn.sigmoid(gates[:, 3 * C:])
        c = f * c + i * g
        h = o * jnp.tanh(c)
        return (h, c), h

    init = (jnp.zeros((NB, C), jnp.float32), jnp.zeros((NB, C), jnp.float32))
    _, ys = jax.lax.scan(step, init, seq)                         # (B, NB, C)
    lstm_out = jnp.transpose(ys, (0, 2, 1))                       # (B, C, NB)
    return lstm_out * x


if __name__ == "__main__":
    key = jax.random.PRNGKey(0)

    def make_params(C, k):
        k1, k2, k3, k4 = jax.random.split(k, 4)
        bound = 1.0 / math.sqrt(C)   # PyTorch nn.LSTM init: U(-1/sqrt(H), 1/sqrt(H))
        w_ih = jax.random.uniform(k1, (4 * C, C), jnp.float32, -bound, bound)
        w_hh = jax.random.uniform(k2, (4 * C, C), jnp.float32, -bound, bound)
        b_ih = jax.random.uniform(k3, (4 * C,), jnp.float32, -bound, bound)
        b_hh = jax.random.uniform(k4, (4 * C,), jnp.float32, -bound, bound)
        return (w_ih, w_hh, b_ih, b_hh)

    # (B, C, L, kwargs) -- block_size == L (NB = 1), the config the module runs.
    configs = [
        (2, 32, 16, {}),                                      # single tile (tl == L)
        (2, 32, 1024, dict(tile_lanes=256)),                  # multi-tile, x resident in VMEM
        (2, 32, 1024, dict(tile_lanes=128, resident=False)),  # multi-tile, streamed re-read
    ]

    for B, C, L, kwargs in configs:
        kp, kx, key = jax.random.split(key, 3)
        params = make_params(C, kp)
        x = jax.random.normal(kx, (B, C, L), jnp.float32)
        block_size = L                                        # NB = 1

        out = jax.block_until_ready(tfilm_forward(x, params, block_size, **kwargs))
        ref = jax.block_until_ready(tfilm_reference(x, params, block_size))

        assert out.shape == (B, C, L)
        np.testing.assert_allclose(np.asarray(out), np.asarray(ref),
                                   rtol=1e-5, atol=1e-5)

    print("KERNEL_OK")
</pallas_src>

<mosaic_0001>
module attributes {stable_mosaic.version = 11 : i64} {
  func.func @kernel(%arg0: i32, %arg1: i32, %arg2: memref<2x32x16xf32, #tpu.memory_space<vmem>>, %arg3: memref<32x128xf32, #tpu.memory_space<vmem>>, %arg4: memref<32x128xf32, #tpu.memory_space<vmem>>, %arg5: memref<1x128xf32, #tpu.memory_space<vmem>>, %arg6: memref<2x32x16xf32, #tpu.memory_space<vmem>>, %arg7: memref<2x32x16xf32, #tpu.memory_space<vmem>>, %arg8: memref<2x32x1xf32, #tpu.memory_space<vmem>>) attributes {dimension_semantics = [#tpu.dimension_semantics<arbitrary>, #tpu.dimension_semantics<arbitrary>], iteration_bounds = array<i64: 2, 1>, scalar_prefetch = 0 : i64, scratch_operands = 2 : i64, tpu.core_type = #tpu.core_type<tc>, window_params = [{transform_indices = @transform_0, window_bounds = array<i64: 2, 32, 16>}, {pipeline_mode = #tpu.pipeline_mode<synchronous>, transform_indices = @transform_1, window_bounds = array<i64: 32, 128>}, {pipeline_mode = #tpu.pipeline_mode<synchronous>, transform_indices = @transform_2, window_bounds = array<i64: 32, 128>}, {pipeline_mode = #tpu.pipeline_mode<synchronous>, transform_indices = @transform_3, window_bounds = array<i64: 1, 128>}, {transform_indices = @transform_4, window_bounds = array<i64: 2, 32, 16>}]} {
    %c0_i32 = arith.constant 0 : i32
    %0 = arith.cmpi eq, %arg0, %c0_i32 : i32
    %1 = arith.extui %0 : i1 to i32
    %c0_i32_0 = arith.constant 0 : i32
    %2 = arith.cmpi ne, %1, %c0_i32_0 : i32
    scf.if %2 {
      %c0_i32_2 = arith.constant 0 : i32
      %6 = arith.cmpi eq, %arg1, %c0_i32_2 : i32
      %7 = arith.extui %6 : i1 to i32
      %c0_i32_3 = arith.constant 0 : i32
      %8 = arith.cmpi ne, %7, %c0_i32_3 : i32
      scf.if %8 {
        %cst = arith.constant 0xFF800000 : f32
        %16 = vector.broadcast %cst : f32 to vector<2x32x16xf32>
        %c0_14 = arith.constant 0 : index
        %c0_15 = arith.constant 0 : index
        %c0_16 = arith.constant 0 : index
        %17 = vector.load %arg7[%c0_14, %c0_15, %c0_16] : memref<2x32x16xf32, #tpu.memory_space<vmem>>, vector<2x32x16xf32>
        tpu.vector_store %arg7[%c0_14, %c0_15, %c0_16], %16 {strides = array<i32>} : memref<2x32x16xf32, #tpu.memory_space<vmem>>, vector<2x32x16xf32>,
      } else {
      }
      %c0 = arith.constant 0 : index
      %c0_4 = arith.constant 0 : index
      %c0_5 = arith.constant 0 : index
      %9 = vector.load %arg2[%c0, %c0_4, %c0_5] : memref<2x32x16xf32, #tpu.memory_space<vmem>>, vector<2x32x16xf32>
      %c0_6 = arith.constant 0 : index
      %c0_7 = arith.constant 0 : index
      %c0_8 = arith.constant 0 : index
      %10 = vector.load %arg7[%c0_6, %c0_7, %c0_8] : memref<2x32x16xf32, #tpu.memory_space<vmem>>, vector<2x32x16xf32>
      %11 = arith.maximumf %10, %9 : vector<2x32x16xf32>
      %c0_9 = arith.constant 0 : index
      %c0_10 = arith.constant 0 : index
      %c0_11 = arith.constant 0 : index
      %12 = vector.load %arg7[%c0_9, %c0_10, %c0_11] : memref<2x32x16xf32, #tpu.memory_space<vmem>>, vector<2x32x16xf32>
      tpu.vector_store %arg7[%c0_9, %c0_10, %c0_11], %11 {strides = array<i32>} : memref<2x32x16xf32, #tpu.memory_space<vmem>>, vector<2x32x16xf32>,
      %c0_i32_12 = arith.constant 0 : i32
      %13 = arith.cmpi eq, %arg1, %c0_i32_12 : i32
      %14 = arith.extui %13 : i1 to i32
      %c0_i32_13 = arith.constant 0 : i32
      %15 = arith.cmpi ne, %14, %c0_i32_13 : i32
      scf.if %15 {
        %c0_14 = arith.constant 0 : index
        %c0_15 = arith.constant 0 : index
        %c0_16 = arith.constant 0 : index
        %16 = vector.load %arg7[%c0_14, %c0_15, %c0_16] : memref<2x32x16xf32, #tpu.memory_space<vmem>>, vector<2x32x16xf32>
        %cst = arith.constant dense<0xFF800000> : vector<2x32xf32>
        %17 = vector.multi_reduction <maximumf>, %16, %cst [2] : vector<2x32x16xf32> to vector<2x32xf32>
        %c0_17 = arith.constant 0 : index
        %c0_18 = arith.constant 0 : index
        %18 = vector.load %arg3[%c0_17, %c0_18] : memref<32x128xf32, #tpu.memory_space<vmem>>, vector<32x128xf32>
        %cst_19 = arith.constant dense<0.000000e+00> : vector<2x128xf32>
        %19 = tpu.matmul %17, %18, %cst_19 {dimension_numbers = #tpu.dot_dimension_numbers<[1], [0], [0], [1], [0, 0, 1, 1], [], []>} : vector<2x32xf32>, vector<32x128xf32>, vector<2x128xf32> -> vector<2x128xf32>
        %c0_20 = arith.constant 0 : index
        %c0_21 = arith.constant 0 : index
        %20 = vector.load %arg5[%c0_20, %c0_21] : memref<1x128xf32, #tpu.memory_space<vmem>>, vector<1x128xf32>
        %21 = vector.broadcast %20 : vector<1x128xf32> to vector<2x128xf32>
        %22 = arith.addf %19, %21 : vector<2x128xf32>
        %c0_22 = arith.constant 0 : index
        %c0_23 = arith.constant 0 : index
        %23 = vector.load %arg4[%c0_22, %c0_23] : memref<32x128xf32, #tpu.memory_space<vmem>>, vector<32x128xf32>
        %24 = tpu.iota {dimensions = array<i32: 0>} : vector<32x32xi32>
        %25 = tpu.iota {dimensions = array<i32: 1>} : vector<32x32xi32>
        %26 = arith.cmpi eq, %24, %25 : vector<32x32xi32>
        %27 = arith.extui %26 : vector<32x32xi1> to vector<32x32xi32>
        %28 = arith.sitofp %27 : vector<32x32xi32> to vector<32x32xf32>
        %cst_24 = arith.constant 0.000000e+00 : f32
        %29 = vector.broadcast %cst_24 : f32 to vector<1x32xf32>
        %cst_25 = arith.constant 0.000000e+00 : f32
        %30 = vector.broadcast %cst_25 : f32 to vector<1x32xf32>
        %31 = vector.extract_strided_slice %22 {offsets = [0, 0], sizes = [1, 128], strides = [1, 1]} : vector<2x128xf32> to vector<1x128xf32>
        %cst_26 = arith.constant dense<0.000000e+00> : vector<1x128xf32>
        %32 = tpu.matmul %29, %23, %cst_26 {dimension_numbers = #tpu.dot_dimension_numbers<[1], [0], [0], [1], [0, 0, 1, 1], [], []>} : vector<1x32xf32>, vector<32x128xf32>, vector<1x128xf32> -> vector<1x128xf32>
        %33 = arith.addf %31, %32 : vector<1x128xf32>
        %34 = vector.extract_strided_slice %33 {offsets = [0, 0], sizes = [1, 32], strides = [1, 1]} : vector<1x128xf32> to vector<1x32xf32>
        %35 = arith.negf %34 : vector<1x32xf32>
        %36 = math.exp %35 : vector<1x32xf32>
        %cst_27 = arith.constant 1.000000e+00 : f32
        %37 = vector.broadcast %cst_27 : f32 to vector<1x32xf32>
        %38 = arith.addf %37, %36 : vector<1x32xf32>
        %39 = arith.divf %37, %38 : vector<1x32xf32>
        %40 = vector.extract_strided_slice %33 {offsets = [0, 32], sizes = [1, 32], strides = [1, 1]} : vector<1x128xf32> to vector<1x32xf32>
        %41 = arith.negf %40 : vector<1x32xf32>
        %42 = math.exp %41 : vector<1x32xf32>
        %cst_28 = arith.constant 1.000000e+00 : f32
        %43 = vector.broadcast %cst_28 : f32 to vector<1x32xf32>
        %44 = arith.addf %43, %42 : vector<1x32xf32>
        %45 = arith.divf %43, %44 : vector<1x32xf32>
        %46 = vector.extract_strided_slice %33 {offsets = [0, 64], sizes = [1, 32], strides = [1, 1]} : vector<1x128xf32> to vector<1x32xf32>
        %47 = math.tanh %46 : vector<1x32xf32>
        %48 = vector.extract_strided_slice %33 {offsets = [0, 96], sizes = [1, 32], strides = [1, 1]} : vector<1x128xf32> to vector<1x32xf32>
        %49 = arith.negf %48 : vector<1x32xf32>
        %50 = math.exp %49 : vector<1x32xf32>
        %cst_29 = arith.constant 1.000000e+00 : f32
        %51 = vector.broadcast %cst_29 : f32 to vector<1x32xf32>
        %52 = arith.addf %51, %50 : vector<1x32xf32>
        %53 = arith.divf %51, %52 : vector<1x32xf32>
        %54 = arith.mulf %45, %30 : vector<1x32xf32>
        %55 = arith.mulf %39, %47 : vector<1x32xf32>
        %56 = arith.addf %54, %55 : vector<1x32xf32>
        %57 = math.tanh %56 : vector<1x32xf32>
        %58 = arith.mulf %53, %57 : vector<1x32xf32>
        %59 = vector.extract_strided_slice %22 {offsets = [1, 0], sizes = [1, 128], strides = [1, 1]} : vector<2x128xf32> to vector<1x128xf32>
        %cst_30 = arith.constant dense<0.000000e+00> : vector<1x128xf32>
        %60 = tpu.matmul %58, %23, %cst_30 {dimension_numbers = #tpu.dot_dimension_numbers<[1], [0], [0], [1], [0, 0, 1, 1], [], []>} : vector<1x32xf32>, vector<32x128xf32>, vector<1x128xf32> -> vector<1x128xf32>
        %61 = arith.addf %59, %60 : vector<1x128xf32>
        %62 = vector.extract_strided_slice %61 {offsets = [0, 0], sizes = [1, 32], strides = [1, 1]} : vector<1x128xf32> to vector<1x32xf32>
        %63 = arith.negf %62 : vector<1x32xf32>
        %64 = math.exp %63 : vector<1x32xf32>
        %cst_31 = arith.constant 1.000000e+00 : f32
        %65 = vector.broadcast %cst_31 : f32 to vector<1x32xf32>
        %66 = arith.addf %65, %64 : vector<1x32xf32>
        %67 = arith.divf %65, %66 : vector<1x32xf32>
        %68 = vector.extract_strided_slice %61 {offsets = [0, 32], sizes = [1, 32], strides = [1, 1]} : vector<1x128xf32> to vector<1x32xf32>
        %69 = arith.negf %68 : vector<1x32xf32>
        %70 = math.exp %69 : vector<1x32xf32>
        %cst_32 = arith.constant 1.000000e+00 : f32
        %71 = vector.broadcast %cst_32 : f32 to vector<1x32xf32>
        %72 = arith.addf %71, %70 : vector<1x32xf32>
        %73 = arith.divf %71, %72 : vector<1x32xf32>
        %74 = vector.extract_strided_slice %61 {offsets = [0, 64], sizes = [1, 32], strides = [1, 1]} : vector<1x128xf32> to vector<1x32xf32>
        %75 = math.tanh %74 : vector<1x32xf32>
        %76 = vector.extract_strided_slice %61 {offsets = [0, 96], sizes = [1, 32], strides = [1, 1]} : vector<1x128xf32> to vector<1x32xf32>
        %77 = arith.negf %76 : vector<1x32xf32>
        %78 = math.exp %77 : vector<1x32xf32>
        %cst_33 = arith.constant 1.000000e+00 : f32
        %79 = vector.broadcast %cst_33 : f32 to vector<1x32xf32>
        %80 = arith.addf %79, %78 : vector<1x32xf32>
        %81 = arith.divf %79, %80 : vector<1x32xf32>
        %82 = arith.mulf %73, %56 : vector<1x32xf32>
        %83 = arith.mulf %67, %75 : vector<1x32xf32>
        %84 = arith.addf %82, %83 : vector<1x32xf32>
        %85 = math.tanh %84 : vector<1x32xf32>
        %86 = arith.mulf %81, %85 : vector<1x32xf32>
        %87 = vector.broadcast %58 : vector<1x32xf32> to vector<32x32xf32>
        %88 = arith.mulf %87, %28 : vector<32x32xf32>
        %cst_34 = arith.constant dense<0.000000e+00> : vector<32xf32>
        %89 = vector.multi_reduction <add>, %88, %cst_34 [1] : vector<32x32xf32> to vector<32xf32>
        %90 = vector.shape_cast %89 : vector<32xf32> to vector<32x1xf32>
        %c0_35 = arith.constant 0 : index
        %c0_36 = arith.constant 0 : index
        %c0_37 = arith.constant 0 : index
        %91 = vector.load %arg8[%c0_35, %c0_36, %c0_37] : memref<2x32x1xf32, #tpu.memory_space<vmem>>, vector<1x32x1xf32>
        %92 = vector.shape_cast %91 : vector<1x32x1xf32> to vector<32x1xf32>
        %93 = vector.shape_cast %90 : vector<32x1xf32> to vector<1x32x1xf32>
        tpu.vector_store %arg8[%c0_35, %c0_36, %c0_37], %93 {strides = array<i32>} : memref<2x32x1xf32, #tpu.memory_space<vmem>>, vector<1x32x1xf32>,
        %94 = vector.broadcast %86 : vector<1x32xf32> to vector<32x32xf32>
        %95 = arith.mulf %94, %28 : vector<32x32xf32>
        %cst_38 = arith.constant dense<0.000000e+00> : vector<32xf32>
        %96 = vector.multi_reduction <add>, %95, %cst_38 [1] : vector<32x32xf32> to vector<32xf32>
        %97 = vector.shape_cast %96 : vector<32xf32> to vector<32x1xf32>
        %c1 = arith.constant 1 : index
        %c0_39 = arith.constant 0 : index
        %c0_40 = arith.constant 0 : index
        %98 = vector.load %arg8[%c1, %c0_39, %c0_40] : memref<2x32x1xf32, #tpu.memory_space<vmem>>, vector<1x32x1xf32>
        %99 = vector.shape_cast %98 : vector<1x32x1xf32> to vector<32x1xf32>
        %100 = vector.shape_cast %97 : vector<32x1xf32> to vector<1x32x1xf32>
        tpu.vector_store %arg8[%c1, %c0_39, %c0_40], %100 {strides = array<i32>} : memref<2x32x1xf32, #tpu.memory_space<vmem>>, vector<1x32x1xf32>,
      } else {
      }
    } else {
    }
    %c1_i32 = arith.constant 1 : i32
    %3 = arith.cmpi eq, %arg0, %c1_i32 : i32
    %4 = arith.extui %3 : i1 to i32
    %c0_i32_1 = arith.constant 0 : i32
    %5 = arith.cmpi ne, %4, %c0_i32_1 : i32
    scf.if %5 {
      %c0 = arith.constant 0 : index
      %c0_2 = arith.constant 0 : index
      %c0_3 = arith.constant 0 : index
      %6 = vector.load %arg2[%c0, %c0_2, %c0_3] : memref<2x32x16xf32, #tpu.memory_space<vmem>>, vector<2x32x16xf32>
      %c0_4 = arith.constant 0 : index
      %c0_5 = arith.constant 0 : index
      %c0_6 = arith.constant 0 : index
      %7 = vector.load %arg8[%c0_4, %c0_5, %c0_6] : memref<2x32x1xf32, #tpu.memory_space<vmem>>, vector<2x32x1xf32>
      %8 = vector.broadcast %7 : vector<2x32x1xf32> to vector<2x32x16xf32>
      %9 = arith.mulf %6, %8 : vector<2x32x16xf32>
      %c0_7 = arith.constant 0 : index
      %c0_8 = arith.constant 0 : index
      %c0_9 = arith.constant 0 : index
      %10 = vector.load %arg6[%c0_7, %c0_8, %c0_9] : memref<2x32x16xf32, #tpu.memory_space<vmem>>, vector<2x32x16xf32>
      tpu.vector_store %arg6[%c0_7, %c0_8, %c0_9], %9 {strides = array<i32>} : memref<2x32x16xf32, #tpu.memory_space<vmem>>, vector<2x32x16xf32>,
    } else {
    }
    return
  }
  func.func @transform_0(%arg0: i32, %arg1: i32) -> (i32, i32, i32) {
    %c0_i32 = arith.constant 0 : i32
    %c0_i32_0 = arith.constant 0 : i32
    %c0_i32_1 = arith.constant 0 : i32
    return %c0_i32, %c0_i32_0, %arg1 : i32, i32, i32
  }
  func.func @transform_1(%arg0: i32, %arg1: i32) -> (i32, i32) {
    %c0_i32 = arith.constant 0 : i32
    %c0_i32_0 = arith.constant 0 : i32
    %c0_i32_1 = arith.constant 0 : i32
    return %c0_i32, %c0_i32_0 : i32, i32
  }
  func.func @transform_2(%arg0: i32, %arg1: i32) -> (i32, i32) {
    %c0_i32 = arith.constant 0 : i32
    %c0_i32_0 = arith.constant 0 : i32
    %c0_i32_1 = arith.constant 0 : i32
    return %c0_i32, %c0_i32_0 : i32, i32
  }
  func.func @transform_3(%arg0: i32, %arg1: i32) -> (i32, i32) {
    %c0_i32 = arith.constant 0 : i32
    %c0_i32_0 = arith.constant 0 : i32
    %c0_i32_1 = arith.constant 0 : i32
    return %c0_i32, %c0_i32_0 : i32, i32
  }
  func.func @transform_4(%arg0: i32, %arg1: i32) -> (i32, i32, i32) {
    %0 = arith.muli %arg1, %arg0 : i32
    %c0_i32 = arith.constant 0 : i32
    %c0_i32_0 = arith.constant 0 : i32
    %c0_i32_1 = arith.constant 0 : i32
    return %c0_i32, %c0_i32_0, %0 : i32, i32, i32
  }
}

</mosaic_0001>

<llo_original>
// kernel: tpu_custom_call.1
$region0: #{tpu_custom_call.1}
  #allocation0 [shape = 'u32[]', space=smem, size = 0x4, offset = 0x4, fixed_abs, tag = 'smem constant byte address 0x4 - core index']
  #allocation1 [shape = 'u32[72,128]{1,0:T(1,128)}', space=vmem, size = 0x9000, scoped, tag = 'internal scratch']
  #allocation2 [shape = 'f32[2,32,16]{2,1,0:T(8,128)}', space=vmem, size = 0x8000, scoped, tag = 'scratch operand']
  #allocation3 [shape = 'f32[2,32,1]{2,1,0:T(8,128)}', space=vmem, size = 0x8000, scoped, tag = 'scratch operand']
  %s0 = inlined_call_operand.vmem [shape: f32[2,32,16], index: 0, kind: input, shape index: {}]
  %s1 = inlined_call_operand.vmem [shape: f32[32,128], index: 1, kind: input, shape index: {}]
  %s2 = inlined_call_operand.vmem [shape: f32[32,128], index: 2, kind: input, shape index: {}]
  %s3 = inlined_call_operand.vmem [shape: f32[1,128], index: 3, kind: input, shape index: {}]
  %s4 = inlined_call_operand.vmem [shape: f32[2,32,16], index: 4, kind: output, shape index: {}]
  %s5 = sld [smem:[#allocation0]]
  $region65: #{tpu_custom_call.1} parent=0
    _
  %s7 = ssub.s32 1, %s5
  %s8 = scalar_select 0, %s7, %s5
  loop: start=0, step=1, limit=4
  $region2: #{tpu_custom_call.1} parent=0 // loop_pre_header
    _
  $region3: #{tpu_custom_call.1} parent=0 // loop_header
    %s10 = sphi 0, %s14
    %p11 = scmp.ge.s32.totalorder %s10, 4
    %s17 = sphi 0, %s29
    %s18 = sphi 0, %s25
    %s19 = sphi 0, %s17
    %s20 = sphi 0, %s18
    %s21 = sphi 0, %s19
    %s22 = sphi 0, %s20
    %s32 = sphi 0, %s34
    %s35 = sphi 0, %s32
    %s36 = sphi 0, %s35
    %s52 = sphi 0, %s36
    %s56 = sphi 0, %s56
    %s58 = sphi 0, %s56
    %s59 = sphi 0, %s58
    %s73 = sphi 0, %s59
    %s77 = sphi 0, %s77
    %s79 = sphi 0, %s77
    %s80 = sphi 0, %s79
    %s94 = sphi 0, %s80
    %s98 = sphi 0, %s98
    %s100 = sphi 0, %s98
    %s101 = sphi 0, %s100
    %s115 = sphi 0, %s101
    %s123 = sphi 0, %s125
    %s126 = sphi 0, %s123
    %s127 = sphi 0, %s126
    %s143 = sphi 0, %s127
  $region4: #{tpu_custom_call.1} parent=0 // loop_header_branch
    %13 = sbr.rel (%p11) target = $region8
  $region5: #{tpu_custom_call.1} parent=0 // loop_body
    %s15 = ssub.s32 %s10, 1
    %s16 = ssub.s32 %s10, 2
    %s23 = sadd.s32 1, %s18
    %p24 = scmp.ge.s32.totalorder %s23, 1
    %s25 = scalar_select %p24, 0, %s23
    %s26 = sadd.s32 1, %s17
    %s27 = scalar_select %p24, %s26, %s17
    %p28 = scmp.ge.s32.totalorder %s27, 2
    %s29 = scalar_select %p28, 0, %s27
    %s30 = ssub.s32 %s18, %s25
    %p31 = scmp.eq.s32.totalorder %s30, 0
    %s33 = sadd.s32 %s32, 1
    %s34 = scalar_select %p31, %s32, %s33
    %p37 = pneg %p31
    %p38 = scmp.eq.s32.totalorder %s10, 1
    %p39 = por %p37, %p38
    %p40 = scmp.ne.s32.totalorder %s32, %s35
    %p41 = scmp.eq.s32.totalorder %s10, 0
    %p42 = por %p40, %p41
    %p43 = scmp.ne.s32.totalorder %s32, %s35
    %p44 = scmp.eq.s32.totalorder %s15, 1
    %p45 = por %p43, %p44
    %p46 = scmp.ne.s32.totalorder %s35, %s36
    %p47 = scmp.eq.s32.totalorder %s15, 0
    %p48 = por %p46, %p47
    %p49 = scmp.ne.s32.totalorder %s35, %s36
    %p50 = scmp.eq.s32.totalorder %s16, 1
    %p51 = por %p49, %p50
    %p53 = scmp.ne.s32.totalorder %s36, %s52
    %p54 = scmp.eq.s32.totalorder %s16, 0
    %p55 = por %p53, %p54
    %s57 = sadd.s32 %s56, 1
    %p60 = scmp.eq.s32.totalorder %s10, 1
    %p61 = scmp.ne.s32.totalorder %s56, %s58
    %p62 = scmp.eq.s32.totalorder %s10, 0
    %p63 = por %p61, %p62
    %p64 = scmp.ne.s32.totalorder %s56, %s58
    %p65 = scmp.eq.s32.totalorder %s15, 1
    %p66 = por %p64, %p65
    %p67 = scmp.ne.s32.totalorder %s58, %s59
    %p68 = scmp.eq.s32.totalorder %s15, 0
    %p69 = por %p67, %p68
    %p70 = scmp.ne.s32.totalorder %s58, %s59
    %p71 = scmp.eq.s32.totalorder %s16, 1
    %p72 = por %p70, %p71
    %p74 = scmp.ne.s32.totalorder %s59, %s73
    %p75 = scmp.eq.s32.totalorder %s16, 0
    %p76 = por %p74, %p75
    %s78 = sadd.s32 %s77, 1
    %p81 = scmp.eq.s32.totalorder %s10, 1
    %p82 = scmp.ne.s32.totalorder %s77, %s79
    %p83 = scmp.eq.s32.totalorder %s10, 0
    %p84 = por %p82, %p83
    %p85 = scmp.ne.s32.totalorder %s77, %s79
    %p86 = scmp.eq.s32.totalorder %s15, 1
    %p87 = por %p85, %p86
    %p88 = scmp.ne.s32.totalorder %s79, %s80
    %p89 = scmp.eq.s32.totalorder %s15, 0
    %p90 = por %p88, %p89
    %p91 = scmp.ne.s32.totalorder %s79, %s80
    %p92 = scmp.eq.s32.totalorder %s16, 1
    %p93 = por %p91, %p92
    %p95 = scmp.ne.s32.totalorder %s80, %s94
    %p96 = scmp.eq.s32.totalorder %s16, 0
    %p97 = por %p95, %p96
    %s99 = sadd.s32 %s98, 1
    %p102 = scmp.eq.s32.totalorder %s10, 1
    %p103 = scmp.ne.s32.totalorder %s98, %s100
    %p104 = scmp.eq.s32.totalorder %s10, 0
    %p105 = por %p103, %p104
    %p106 = scmp.ne.s32.totalorder %s98, %s100
    %p107 = scmp.eq.s32.totalorder %s15, 1
    %p108 = por %p106, %p107
    %p109 = scmp.ne.s32.totalorder %s100, %s101
    %p110 = scmp.eq.s32.totalorder %s15, 0
    %p111 = por %p109, %p110
    %p112 = scmp.ne.s32.totalorder %s100, %s101
    %p113 = scmp.eq.s32.totalorder %s16, 1
    %p114 = por %p112, %p113
    %p116 = scmp.ne.s32.totalorder %s101, %s115
    %p117 = scmp.eq.s32.totalorder %s16, 0
    %p118 = por %p116, %p117
    %s119 = smul.u32 %s18, %s17
    %s120 = smul.u32 %s25, %s29
    %s121 = ssub.s32 %s119, %s120
    %p122 = scmp.eq.s32.totalorder %s121, 0
    %s124 = sadd.s32 %s123, 1
    %s125 = scalar_select %p122, %s123, %s124
    %p128 = pneg %p122
    %p129 = scmp.eq.s32.totalorder %s10, 1
    %p130 = por %p128, %p129
    %p131 = scmp.ne.s32.totalorder %s123, %s126
    %p132 = scmp.eq.s32.totalorder %s10, 0
    %p133 = por %p131, %p132
    %p134 = scmp.ne.s32.totalorder %s123, %s126
    %p135 = scmp.eq.s32.totalorder %s15, 1
    %p136 = por %p134, %p135
    %p137 = scmp.ne.s32.totalorder %s126, %s127
    %p138 = scmp.eq.s32.totalorder %s15, 0
    %p139 = por %p137, %p138
    %p140 = scmp.ne.s32.totalorder %s126, %s127
    %p141 = scmp.eq.s32.totalorder %s16, 1
    %p142 = por %p140, %p141
    %p144 = scmp.ne.s32.totalorder %s127, %s143
    %p145 = scmp.eq.s32.totalorder %s16, 0
    %p146 = por %p144, %p145
    %p147 = scmp.le.s32.totalorder 1, %s10
    %p148 = scmp.lt.s32.totalorder %s10, 3
    %p149 = pnand %p147, %p148
    %p150 = pneg %p149
    // Predicated region
    $region9: #{tpu_custom_call.1} parent=5 // pred_check
      _
    $region10: #{tpu_custom_call.1} parent=5 // pred_check_branch
      %152 = sbr.rel (%p149) target = $region12
    $region11: #{tpu_custom_call.1} parent=5 // pred_region
      %s153 = ssub.s32 %s10, 1
      // Predicated region
      $region13: #{tpu_custom_call.1} parent=11 // pred_check
        %p154 = pneg %p48
      $region14: #{tpu_custom_call.1} parent=11 // pred_check_branch
        %156 = sbr.rel (%p154) target = $region16
      $region15: #{tpu_custom_call.1} parent=11 // pred_region
        %p157 = scmp.lt.s32.totalorder %s20, 0
        %s158 = scalar_select %p157, %s20, 0
        %s159 = smul.addr %s158, 8
        %s160 = scalar_lea.vmem %s0, %s159
      $region16: #{tpu_custom_call.1} parent=11 // pred_fallthru
        _
      // Predicated region
      $region17: #{tpu_custom_call.1} parent=11 // pred_check
        %p161 = pneg %p69
      $region18: #{tpu_custom_call.1} parent=11 // pred_check_branch
        %163 = sbr.rel (%p161) target = $region20
      $region19: #{tpu_custom_call.1} parent=11 // pred_region
        _
      $region20: #{tpu_custom_call.1} parent=11 // pred_fallthru
        _
      // Predicated region
      $region21: #{tpu_custom_call.1} parent=11 // pred_check
        %p164 = pneg %p90
      $region22: #{tpu_custom_call.1} parent=11 // pred_check_branch
        %166 = sbr.rel (%p164) target = $region24
      $region23: #{tpu_custom_call.1} parent=11 // pred_region
        _
      $region24: #{tpu_custom_call.1} parent=11 // pred_fallthru
        _
      // Predicated region
      $region25: #{tpu_custom_call.1} parent=11 // pred_check
        %p167 = pneg %p111
      $region26: #{tpu_custom_call.1} parent=11 // pred_check_branch
        %169 = sbr.rel (%p167) target = $region28
      $region27: #{tpu_custom_call.1} parent=11 // pred_region
        _
      $region28: #{tpu_custom_call.1} parent=11 // pred_fallthru
        _
    $region12: #{tpu_custom_call.1} parent=5 // pred_fallthru
      _
    %p170 = scmp.lt.s32.totalorder %s10, 2
    // Predicated region
    $region29: #{tpu_custom_call.1} parent=5 // pred_check
      %p171 = pneg %p170
    $region30: #{tpu_custom_call.1} parent=5 // pred_check_branch
      %173 = sbr.rel (%p171) target = $region32
    $region31: #{tpu_custom_call.1} parent=5 // pred_region
      _
    $region32: #{tpu_custom_call.1} parent=5 // pred_fallthru
      _
    %p174 = scmp.le.s32.totalorder 1, %s10
    %p175 = scmp.lt.s32.totalorder %s10, 3
    %p176 = pnand %p174, %p175
    %p177 = pneg %p176
    // Predicated region
    $region33: #{tpu_custom_call.1} parent=5 // pred_check
      _
    $region34: #{tpu_custom_call.1} parent=5 // pred_check_branch
      %179 = sbr.rel (%p176) target = $region36
    $region35: #{tpu_custom_call.1} parent=5 // pred_region
      %s180 = ssub.s32 %s10, 1
      %p181 = scmp.lt.s32.totalorder %s20, 0
      %s182 = scalar_select %p181, %s20, 0
      %s183 = smul.addr %s182, 8
      %s184 = scalar_lea.vmem %s0, %s183
      %p185 = pneg %p48
      %p186 = pneg %p45
      %p187 = pneg %p69
      %p188 = pneg %p66
      %p189 = pneg %p90
      %p190 = pneg %p87
      %p191 = pneg %p111
      %p192 = pneg %p108
      %p193 = pneg %p139
      %p194 = pneg %p136
      %s195 = smul.u32 %s20, %s19
      %p196 = scmp.lt.s32.totalorder %s195, 0
      %s197 = scalar_select %p196, %s195, 0
      %s198 = smul.addr %s197, 8
      %s199 = scalar_lea.vmem %s4, %s198
      %p200 = scmp.lt.s32.totalorder %s20, 0
      %s201 = scalar_select %p200, %s20, 0
      %s202 = smul.addr %s201, 8
      %s203 = scalar_lea.vmem %s0, %s202
      %s204 = smul.u32 %s20, %s19
      %p205 = scmp.lt.s32.totalorder %s204, 0
      %s206 = scalar_select %p205, %s204, 0
      %s207 = smul.addr %s206, 8
      %s208 = scalar_lea.vmem %s4, %s207
      %s209 = smul.u32 %s20, %s19
      %p210 = scmp.eq.s32.totalorder %s19, 0
      // Predicated region
      $region37: #{tpu_custom_call.1} parent=35 // pred_check
        %p211 = pneg %p210
      $region38: #{tpu_custom_call.1} parent=35 // pred_check_branch
        %213 = sbr.rel (%p211) target = $region40
      $region39: #{tpu_custom_call.1} parent=35 // pred_region
        %p214 = scmp.eq.s32.totalorder %s20, 0
        // Predicated region
        $region41: #{tpu_custom_call.1} parent=39 // pred_check
          %p215 = pneg %p214
        $region42: #{tpu_custom_call.1} parent=39 // pred_check_branch
          %217 = sbr.rel (%p215) target = $region44
        $region43: #{tpu_custom_call.1} parent=39 // pred_region
          %vm218 = vcmask 130048
          %219 = vst.msk [vmem:[#allocation2] sm:$0xff] %vm218, -inf
          %220 = vst.msk [vmem:[#allocation2 + $0x8] sm:$0xff] %vm218, -inf
          %221 = vst.msk [vmem:[#allocation2 + $0x10] sm:$0xff] %vm218, -inf
          %222 = vst.msk [vmem:[#allocation2 + $0x18] sm:$0xff] %vm218, -inf
          %223 = vst.msk [vmem:[#allocation2 + $0x20] sm:$0xff] %vm218, -inf
          %224 = vst.msk [vmem:[#allocation2 + $0x28] sm:$0xff] %vm218, -inf
          %225 = vst.msk [vmem:[#allocation2 + $0x30] sm:$0xff] %vm218, -inf
          %226 = vst.msk [vmem:[#allocation2 + $0x38] sm:$0xff] %vm218, -inf
        $region44: #{tpu_custom_call.1} parent=39 // pred_fallthru
          _
        %v227 = vld [vmem:[%s203] sm:$0xff]
        %v228 = vld [vmem:[%s203 + $0x8] sm:$0xff]
        %v229 = vld [vmem:[%s203 + $0x10] sm:$0xff]
        %v230 = vld [vmem:[%s203 + $0x18] sm:$0xff]
        %v231 = vld [vmem:[%s203 + $0x20] sm:$0xff]
        %v232 = vld [vmem:[%s203 + $0x28] sm:$0xff]
        %v233 = vld [vmem:[%s203 + $0x30] sm:$0xff]
        %v234 = vld [vmem:[%s203 + $0x38] sm:$0xff]
        %v235 = vld [vmem:[#allocation2] sm:$0xff]
        %v236 = vld [vmem:[#allocation2 + $0x8] sm:$0xff]
        %v237 = vld [vmem:[#allocation2 + $0x10] sm:$0xff]
        %v238 = vld [vmem:[#allocation2 + $0x18] sm:$0xff]
        %v239 = vld [vmem:[#allocation2 + $0x20] sm:$0xff]
        %v240 = vld [vmem:[#allocation2 + $0x28] sm:$0xff]
        %v241 = vld [vmem:[#allocation2 + $0x30] sm:$0xff]
        %v242 = vld [vmem:[#allocation2 + $0x38] sm:$0xff]
        %v243 = vmax.f32 %v235, %v227
        %v244 = vmax.f32 %v236, %v228
        %v245 = vmax.f32 %v237, %v229
        %v246 = vmax.f32 %v238, %v230
        %v247 = vmax.f32 %v239, %v231
        %v248 = vmax.f32 %v240, %v232
        %v249 = vmax.f32 %v241, %v233
        %v250 = vmax.f32 %v242, %v234
        %vm251 = vcmask 130048
        %252 = vst.msk [vmem:[#allocation2] sm:$0xff] %vm251, %v243
        %253 = vst.msk [vmem:[#allocation2 + $0x8] sm:$0xff] %vm251, %v244
        %254 = vst.msk [vmem:[#allocation2 + $0x10] sm:$0xff] %vm251, %v245
        %255 = vst.msk [vmem:[#allocation2 + $0x18] sm:$0xff] %vm251, %v246
        %256 = vst.msk [vmem:[#allocation2 + $0x20] sm:$0xff] %vm251, %v247
        %257 = vst.msk [vmem:[#allocation2 + $0x28] sm:$0xff] %vm251, %v248
        %258 = vst.msk [vmem:[#allocation2 + $0x30] sm:$0xff] %vm251, %v249
        %259 = vst.msk [vmem:[#allocation2 + $0x38] sm:$0xff] %vm251, %v250
        // Predicated region
        $region45: #{tpu_custom_call.1} parent=39 // pred_check
          %p260 = pneg %p214
        $region46: #{tpu_custom_call.1} parent=39 // pred_check_branch
          %262 = sbr.rel (%p260) target = $region48
        $region47: #{tpu_custom_call.1} parent=39 // pred_region
          %v263 = vld [vmem:[#allocation2] sm:$0xff]
          %v264 = vld [vmem:[#allocation2 + $0x8] sm:$0xff]
          %v265 = vld [vmem:[#allocation2 + $0x10] sm:$0xff]
          %v266 = vld [vmem:[#allocation2 + $0x18] sm:$0xff]
          %v267 = vld [vmem:[#allocation2 + $0x20] sm:$0xff]
          %v268 = vld [vmem:[#allocation2 + $0x28] sm:$0xff]
          %v269 = vld [vmem:[#allocation2 + $0x30] sm:$0xff]
          %v270 = vld [vmem:[#allocation2 + $0x38] sm:$0xff]
          %v271 = vsel %vm251, %v263, -inf
          %272 = vmax.xlane.f32.xlu0 %v271
          %v273 = vpop.xlane.xlu0 %272
          %v274 = vsel %vm251, %v264, -inf
          %275 = vmax.xlane.f32.xlu0 %v274
          %v276 = vpop.xlane.xlu0 %275
          %v277 = vsel %vm251, %v265, -inf
          %278 = vmax.xlane.f32.xlu0 %v277
          %v279 = vpop.xlane.xlu0 %278
          %v280 = vsel %vm251, %v266, -inf
          %281 = vmax.xlane.f32.xlu0 %v280
          %v282 = vpop.xlane.xlu0 %281
          %v283 = vsel %vm251, %v267, -inf
          %284 = vmax.xlane.f32.xlu0 %v283
          %v285 = vpop.xlane.xlu0 %284
          %v286 = vsel %vm251, %v268, -inf
          %287 = vmax.xlane.f32.xlu0 %v286
          %v288 = vpop.xlane.xlu0 %287
          %v289 = vsel %vm251, %v269, -inf
          %290 = vmax.xlane.f32.xlu0 %v289
          %v291 = vpop.xlane.xlu0 %290
          %v292 = vsel %vm251, %v270, -inf
          %293 = vmax.xlane.f32.xlu0 %v292
          %v294 = vpop.xlane.xlu0 %293
          %v295 = vld [vmem:[%s1] sm:$0xff]
          %v296 = vld [vmem:[%s1 + $0x8] sm:$0xff]
          %v297 = vld [vmem:[%s1 + $0x10] sm:$0xff]
          %v298 = vld [vmem:[%s1 + $0x18] sm:$0xff]
          %v299 = vld [vmem:[%s3] sm:$0x1]
          %v301 = vperm.slane %v299, 0
          %v311 = vlaneseq
          %v312 = vand.u32 %v311, 127
          %v313 = vperm.slane %v273, %v312
          %v314 = vadd.s32 %v312, 4294967288
          %v315 = vperm.slane %v276, %v314
          %vm316 = vcmask 130112
          %v317 = vsel %vm316, %v315, %v313
          %v318 = vadd.s32 %v312, 4294967280
          %v319 = vperm.slane %v279, %v318
          %vm320 = vcmask 195712
          %v321 = vsel %vm320, %v319, %v317
          %v322 = vadd.s32 %v312, 4294967272
          %v323 = vperm.slane %v282, %v322
          %vm324 = vcmask 261312
          %v325 = vsel %vm324, %v323, %v321
          %v326 = vperm.slane %v285, %v312
          %v327 = vperm.slane %v288, %v314
          %v328 = vsel %vm316, %v327, %v326
          %v329 = vperm.slane %v291, %v318
          %v330 = vsel %vm320, %v329, %v328
          %v331 = vperm.slane %v294, %v322
          %v332 = vsel %vm324, %v331, %v330
          %vm333 = vcmask 1041409
          %v334 = vsel %vm333, %v332, %v325
          %vm335 = vcmask 261120
          %v336 = vsel %vm335, %v334, 0
          %338 = vmatpush.msra.mxu0 0.0
          %339 = vmatpush.msra.mxu0 0.0
          %340 = vmatpush.msra.mxu0 0.0
          %341 = vmatpush.msra.mxu0 0.0
          %342 = vmatpush.msra.mxu0 0.0
          %343 = vmatpush.msra.mxu0 0.0
          %344 = vmatpush.msra.mxu0 0.0
          %345 = vmatpush.msra.mxu0 0.0
          %346 = vmatpush.msra.mxu0 0.0
          %347 = vmatpush.msra.mxu0 0.0
          %348 = vmatpush.msra.mxu0 0.0
          %349 = vmatpush.msra.mxu0 0.0
          %350 = vmatpush.msra.mxu0 %v298
          %351 = vmatpush.msra.mxu0 %v297
          %352 = vmatpush.msra.mxu0 %v296
          %353 = vmatpush.msra.mxu0 %v295
          %354 = vmatmul.f32.gmra.mxu0 %v336
          %v355 = vpop.f32.mrf.mxu0
          %v356 = vadd.f32 %v301, %v355
          %357 = vdwg.mxu0
          %v358 = vld [vmem:[%s2] sm:$0xff]
          %v359 = vld [vmem:[%s2 + $0x8] sm:$0xff]
          %v360 = vld [vmem:[%s2 + $0x10] sm:$0xff]
          %v361 = vld [vmem:[%s2 + $0x18] sm:$0xff]
          %v362 = vlaneseq
          %v363 = vshrl.u32 %v362, 7
          %v364 = vadd.s32 %v363, 8
          %v365 = vadd.s32 %v363, 16
          %v366 = vadd.s32 %v363, 24
          %vm367 = vcmp.eq.s32.totalorder %v363, %v312
          %vm368 = vcmp.eq.s32.totalorder %v364, %v312
          %vm369 = vcmp.eq.s32.totalorder %v365, %v312
          %vm370 = vcmp.eq.s32.totalorder %v366, %v312
          %v371 = vsel %vm367, 1, 0
          %v372 = vsel %vm368, 1, 0
          %v373 = vsel %vm369, 1, 0
          %v374 = vsel %vm370, 1, 0
          %v375 = vcvt.s32.f32 %v371
          %v376 = vcvt.s32.f32 %v372
          %v377 = vcvt.s32.f32 %v373
          %v378 = vcvt.s32.f32 %v374
          %v380 = vsel %vm335, 0.0, 0
          %382 = vmatpush.msra.mxu0 0.0
          %383 = vmatpush.msra.mxu0 0.0
          %384 = vmatpush.msra.mxu0 0.0
          %385 = vmatpush.msra.mxu0 0.0
          %386 = vmatpush.msra.mxu0 0.0
          %387 = vmatpush.msra.mxu0 0.0
          %388 = vmatpush.msra.mxu0 0.0
          %389 = vmatpush.msra.mxu0 0.0
          %390 = vmatpush.msra.mxu0 0.0
          %391 = vmatpush.msra.mxu0 0.0
          %392 = vmatpush.msra.mxu0 0.0
          %393 = vmatpush.msra.mxu0 0.0
          %394 = vmatpush.msra.mxu0 %v361
          %395 = vmatpush.msra.mxu0 %v360
          %396 = vmatpush.msra.mxu0 %v359
          %397 = vmatpush.msra.mxu0 %v358
          %398 = vmatmul.f32.gmra.mxu0 %v380
          %v399 = vpop.f32.mrf.mxu0
          %v400 = vadd.f32 0.0, %v399
          %401 = vdwg.mxu0
          %v402 = vadd.f32 %v356, %v400
          %v403 = vxor.u32 %v402, 2147483648
          %v404 = vmul.f32 %v403, 1.442695
          %v405 = vpow.pop %v404
          %v406 = vadd.f32 %v405, 1.0
          %v407 = vrcp.pop %v406
          %v408 = vmul.f32 %v406, %v407
          %v409 = vsub.f32 1.0, %v408
          %v410 = vmul.f32 %v407, %v409
          %v411 = vadd.f32 %v407, %v410
          %vm412 = vweird.f32 %v406
          %vm413 = vweird.f32 %v407
          %vm414 = vmor %vm412, %vm413
          %v415 = vsel %vm414, %v407, %v411
          %v416 = vand.u32 2147483647, %v406
          %vm417 = vcmp.eq.f32.partialorder %v416, 8.507059e+37
          %v418 = vand.u32 %v406, 2147483648
          %v419 = vor.u32 1.1754944e-38, %v418
          %v420 = vsel %vm417, %v419, %v415
          %v421 = vmul.f32 1.0, %v420
          %v422 = vtanh.pop %v402
          %v423 = vmul.f32 %v421, 0.0
          %425 = vrot.lane.b32.xlu0 %v422, 64
          %v426 = vpop.permute.xlu0 %425
          %v428 = vmul.f32 %v421, %v426
          %430 = vrot.lane.b32.xlu0 %v428, 32
          %v431 = vpop.permute.xlu0 %430
          %v433 = vadd.f32 %v423, %v431
          %v434 = vtanh.pop %v433
          %436 = vrot.lane.b32.xlu0 %v434, 64
          %v437 = vpop.permute.xlu0 %436
          %v439 = vmul.f32 %v421, %v437
          %441 = vrot.lane.b32.xlu0 %v439, 32
          %v442 = vpop.permute.xlu0 %441
          %v443 = vsel %vm335, %v442, 0
          %445 = vmatpush.msra.mxu0 0.0
          %446 = vmatpush.msra.mxu0 0.0
          %447 = vmatpush.msra.mxu0 0.0
          %448 = vmatpush.msra.mxu0 0.0
          %449 = vmatpush.msra.mxu0 0.0
          %450 = vmatpush.msra.mxu0 0.0
          %451 = vmatpush.msra.mxu0 0.0
          %452 = vmatpush.msra.mxu0 0.0
          %453 = vmatpush.msra.mxu0 0.0
          %454 = vmatpush.msra.mxu0 0.0
          %455 = vmatpush.msra.mxu0 0.0
          %456 = vmatpush.msra.mxu0 0.0
          %457 = vmatpush.msra.mxu0 %v361
          %458 = vmatpush.msra.mxu0 %v360
          %459 = vmatpush.msra.mxu0 %v359
          %460 = vmatpush.msra.mxu0 %v358
          %461 = vmatmul.f32.gmra.mxu0 %v443
          %v462 = vpop.f32.mrf.mxu0
          %v463 = vadd.f32 0.0, %v462
          %464 = vdwg.mxu0
          %v466 = vrot.slane %v463, 7
          %v468 = vadd.f32 %v356, %v466
          %v469 = vxor.u32 %v468, 2147483648
          %v470 = vmul.f32 %v469, 1.442695
          %v471 = vpow.pop %v470
          %v472 = vadd.f32 %v471, 1.0
          %v473 = vrcp.pop %v472
          %v474 = vmul.f32 %v472, %v473
          %v475 = vsub.f32 1.0, %v474
          %v476 = vmul.f32 %v473, %v475
          %v477 = vadd.f32 %v473, %v476
          %vm478 = vweird.f32 %v472
          %vm479 = vweird.f32 %v473
          %vm480 = vmor %vm478, %vm479
          %v481 = vsel %vm480, %v473, %v477
          %v482 = vand.u32 2147483647, %v472
          %vm483 = vcmp.eq.f32.partialorder %v482, 8.507059e+37
          %v484 = vand.u32 %v472, 2147483648
          %v485 = vor.u32 1.1754944e-38, %v484
          %v486 = vsel %vm483, %v485, %v481
          %v487 = vmul.f32 1.0, %v486
          %v488 = vtanh.pop %v468
          %v490 = vrot.slane %v433, 7
          %v492 = vmul.f32 %v487, %v490
          %494 = vrot.lane.b32.xlu0 %v488, 64
          %v495 = vpop.permute.xlu0 %494
          %v497 = vmul.f32 %v487, %v495
          %499 = vrot.lane.b32.xlu0 %v497, 32
          %v500 = vpop.permute.xlu0 %499
          %v502 = vadd.f32 %v492, %v500
          %v503 = vtanh.pop %v502
          %505 = vrot.lane.b32.xlu0 %v503, 64
          %v506 = vpop.permute.xlu0 %505
          %v508 = vmul.f32 %v487, %v506
          %v509 = vperm.slane %v439, 0
          %514 = vrot.lane.b32.xlu0 %v375, 96
          %v515 = vpop.permute.xlu0 %514
          %516 = vrot.lane.b32.xlu0 %v376, 96
          %v517 = vpop.permute.xlu0 %516
          %518 = vrot.lane.b32.xlu0 %v377, 96
          %v519 = vpop.permute.xlu0 %518
          %520 = vrot.lane.b32.xlu0 %v378, 96
          %v521 = vpop.permute.xlu0 %520
          %v526 = vmul.f32 %v509, %v515
          %v527 = vmul.f32 %v509, %v517
          %v528 = vmul.f32 %v509, %v519
          %v529 = vmul.f32 %v509, %v521
          %534 = vrot.lane.b32.xlu0 %v526, 32
          %v535 = vpop.permute.xlu0 %534
          %536 = vrot.lane.b32.xlu0 %v527, 32
          %v537 = vpop.permute.xlu0 %536
          %538 = vrot.lane.b32.xlu0 %v528, 32
          %v539 = vpop.permute.xlu0 %538
          %540 = vrot.lane.b32.xlu0 %v529, 32
          %v541 = vpop.permute.xlu0 %540
          %v546 = vsel %vm335, %v535, 0.0
          %547 = vadd.xlane.f32.xlu0 %v546
          %v548 = vpop.xlane.xlu0 %547
          %v549 = vsel %vm335, %v537, 0.0
          %550 = vadd.xlane.f32.xlu0 %v549
          %v551 = vpop.xlane.xlu0 %550
          %v552 = vsel %vm335, %v539, 0.0
          %553 = vadd.xlane.f32.xlu0 %v552
          %v554 = vpop.xlane.xlu0 %553
          %v555 = vsel %vm335, %v541, 0.0
          %556 = vadd.xlane.f32.xlu0 %v555
          %v557 = vpop.xlane.xlu0 %556
          %vm558 = vcmask 7168
          %559 = vst.msk [vmem:[#allocation3] sm:$0xff] %vm558, %v548
          %560 = vst.msk [vmem:[#allocation3 + $0x8] sm:$0xff] %vm558, %v551
          %561 = vst.msk [vmem:[#allocation3 + $0x10] sm:$0xff] %vm558, %v554
          %562 = vst.msk [vmem:[#allocation3 + $0x18] sm:$0xff] %vm558, %v557
          %v563 = vperm.slane %v508, 1
          %v564 = vmul.f32 %v563, %v515
          %v565 = vmul.f32 %v563, %v517
          %v566 = vmul.f32 %v563, %v519
          %v567 = vmul.f32 %v563, %v521
          %572 = vrot.lane.b32.xlu0 %v564, 32
          %v573 = vpop.permute.xlu0 %572
          %574 = vrot.lane.b32.xlu0 %v565, 32
          %v575 = vpop.permute.xlu0 %574
          %576 = vrot.lane.b32.xlu0 %v566, 32
          %v577 = vpop.permute.xlu0 %576
          %578 = vrot.lane.b32.xlu0 %v567, 32
          %v579 = vpop.permute.xlu0 %578
          %v584 = vsel %vm335, %v573, 0.0
          %585 = vadd.xlane.f32.xlu0 %v584
          %v586 = vpop.xlane.xlu0 %585
          %v587 = vsel %vm335, %v575, 0.0
          %588 = vadd.xlane.f32.xlu0 %v587
          %v589 = vpop.xlane.xlu0 %588
          %v590 = vsel %vm335, %v577, 0.0
          %591 = vadd.xlane.f32.xlu0 %v590
          %v592 = vpop.xlane.xlu0 %591
          %v593 = vsel %vm335, %v579, 0.0
          %594 = vadd.xlane.f32.xlu0 %v593
          %v595 = vpop.xlane.xlu0 %594
          %s596 = scalar_lea.vmem [#allocation3], 32
          %597 = vst.msk [vmem:[%s596] sm:$0xff] %vm558, %v586
          %598 = vst.msk [vmem:[%s596 + $0x8] sm:$0xff] %vm558, %v589
          %599 = vst.msk [vmem:[%s596 + $0x10] sm:$0xff] %vm558, %v592
          %600 = vst.msk [vmem:[%s596 + $0x18] sm:$0xff] %vm558, %v595
        $region48: #{tpu_custom_call.1} parent=39 // pred_fallthru
          _
      $region40: #{tpu_custom_call.1} parent=35 // pred_fallthru
        _
      %p601 = scmp.eq.s32.totalorder %s19, 1
      // Predicated region
      $region49: #{tpu_custom_call.1} parent=35 // pred_check
        %p602 = pneg %p601
      $region50: #{tpu_custom_call.1} parent=35 // pred_check_branch
        %604 = sbr.rel (%p602) target = $region52
      $region51: #{tpu_custom_call.1} parent=35 // pred_region
        %v605 = vld [vmem:[%s203] sm:$0xff]
        %v606 = vld [vmem:[%s203 + $0x8] sm:$0xff]
        %v607 = vld [vmem:[%s203 + $0x10] sm:$0xff]
        %v608 = vld [vmem:[%s203 + $0x18] sm:$0xff]
        %v609 = vld [vmem:[%s203 + $0x20] sm:$0xff]
        %v610 = vld [vmem:[%s203 + $0x28] sm:$0xff]
        %v611 = vld [vmem:[%s203 + $0x30] sm:$0xff]
        %v612 = vld [vmem:[%s203 + $0x38] sm:$0xff]
        %v613 = vld [vmem:[#allocation3] sm:$0xff]
        %v614 = vld [vmem:[#allocation3 + $0x8] sm:$0xff]
        %v615 = vld [vmem:[#allocation3 + $0x10] sm:$0xff]
        %v616 = vld [vmem:[#allocation3 + $0x18] sm:$0xff]
        %v617 = vld [vmem:[#allocation3 + $0x20] sm:$0xff]
        %v618 = vld [vmem:[#allocation3 + $0x28] sm:$0xff]
        %v619 = vld [vmem:[#allocation3 + $0x30] sm:$0xff]
        %v620 = vld [vmem:[#allocation3 + $0x38] sm:$0xff]
        %622 = vset.pattern.permute.xlu0 0
        %623 = vperm.xlu0 %622, %v613
        %v624 = vpop.permute.xlu0 %623
        %627 = vset.pattern.permute.xlu0 0
        %628 = vperm.xlu0 %627, %v614
        %v629 = vpop.permute.xlu0 %628
        %632 = vset.pattern.permute.xlu0 0
        %633 = vperm.xlu0 %632, %v615
        %v634 = vpop.permute.xlu0 %633
        %637 = vset.pattern.permute.xlu0 0
        %638 = vperm.xlu0 %637, %v616
        %v639 = vpop.permute.xlu0 %638
        %642 = vset.pattern.permute.xlu0 0
        %643 = vperm.xlu0 %642, %v617
        %v644 = vpop.permute.xlu0 %643
        %647 = vset.pattern.permute.xlu0 0
        %648 = vperm.xlu0 %647, %v618
        %v649 = vpop.permute.xlu0 %648
        %652 = vset.pattern.permute.xlu0 0
        %653 = vperm.xlu0 %652, %v619
        %v654 = vpop.permute.xlu0 %653
        %657 = vset.pattern.permute.xlu0 0
        %658 = vperm.xlu0 %657, %v620
        %v659 = vpop.permute.xlu0 %658
        %v661 = vmul.f32 %v605, %v624
        %v662 = vmul.f32 %v606, %v629
        %v663 = vmul.f32 %v607, %v634
        %v664 = vmul.f32 %v608, %v639
        %v665 = vmul.f32 %v609, %v644
        %v666 = vmul.f32 %v610, %v649
        %v667 = vmul.f32 %v611, %v654
        %v668 = vmul.f32 %v612, %v659
        %vm669 = vcmask 130048
        %670 = vst.msk [vmem:[%s208] sm:$0xff] %vm669, %v661
        %671 = vst.msk [vmem:[%s208 + $0x8] sm:$0xff] %vm669, %v662
        %672 = vst.msk [vmem:[%s208 + $0x10] sm:$0xff] %vm669, %v663
        %673 = vst.msk [vmem:[%s208 + $0x18] sm:$0xff] %vm669, %v664
        %674 = vst.msk [vmem:[%s208 + $0x20] sm:$0xff] %vm669, %v665
        %675 = vst.msk [vmem:[%s208 + $0x28] sm:$0xff] %vm669, %v666
        %676 = vst.msk [vmem:[%s208 + $0x30] sm:$0xff] %vm669, %v667
        %677 = vst.msk [vmem:[%s208 + $0x38] sm:$0xff] %vm669, %v668
      $region52: #{tpu_custom_call.1} parent=35 // pred_fallthru
        _
      %s678 = smul.u32 %s20, %s19
      %p679 = scmp.lt.s32.totalorder %s678, 0
      %s680 = scalar_select %p679, %s678, 0
      %s681 = smul.addr %s680, 8
      %s682 = scalar_lea.vmem %s4, %s681
      // Predicated region
      $region53: #{tpu_custom_call.1} parent=35 // pred_check
        %p683 = pneg %p136
      $region54: #{tpu_custom_call.1} parent=35 // pred_check_branch
        %685 = sbr.rel (%p683) target = $region56
      $region55: #{tpu_custom_call.1} parent=35 // pred_region
        %s686 = smul.u32 %s20, %s19
      $region56: #{tpu_custom_call.1} parent=35 // pred_fallthru
        _
    $region36: #{tpu_custom_call.1} parent=5 // pred_fallthru
      _
    %p687 = scmp.le.s32.totalorder 2, %s10
    // Predicated region
    $region57: #{tpu_custom_call.1} parent=5 // pred_check
      %p688 = pneg %p687
    $region58: #{tpu_custom_call.1} parent=5 // pred_check_branch
      %690 = sbr.rel (%p688) target = $region60
    $region59: #{tpu_custom_call.1} parent=5 // pred_region
      %s691 = ssub.s32 %s10, 2
      // Predicated region
      $region61: #{tpu_custom_call.1} parent=59 // pred_check
        %p692 = pneg %p142
      $region62: #{tpu_custom_call.1} parent=59 // pred_check_branch
        %694 = sbr.rel (%p692) target = $region64
      $region63: #{tpu_custom_call.1} parent=59 // pred_region
        %s695 = smul.u32 %s22, %s21
        %p696 = scmp.lt.s32.totalorder %s695, 0
        %s697 = scalar_select %p696, %s695, 0
        %s698 = smul.addr %s697, 8
        %s699 = scalar_lea.vmem %s4, %s698
      $region64: #{tpu_custom_call.1} parent=59 // pred_fallthru
        _
    $region60: #{tpu_custom_call.1} parent=5 // pred_fallthru
      _
  $region6: #{tpu_custom_call.1} parent=0 // loop_footer
    %s14 = sadd.s32 1, %s10
  $region7: #{tpu_custom_call.1} parent=0 // loop_footer_branch
    %9 = sbr.rel target = $region3
  $region8: #{tpu_custom_call.1} parent=0 // loop_exit
    _

</llo_original>
